<compile_context>
chip_gen: v7x
topology: tpu7x:2x2x1
jax: 0.10.0
libtpu: 0.0.40
codegen_flags: <defaults>
</compile_context>

<pallas_src>
import jax
import jax.numpy as jnp
from jax.experimental import pallas as pl
from jax.experimental.pallas import tpu as pltpu


# ---- static layout of the packed, TRANSPOSED parameter slab ----------------
# rows are 8-aligned; each transposed weight (out,in) sits at lanes [0,in) and
# its bias sits in lane `in` of the same rows.
W1_R, W2_R, W34_R, W5_R, W6_R = 0, 16, 24, 32, 48      # row offsets
B1_C, B2_C, B34_C, B5_C, B6_C = 30, 16, 8, 8, 16        # bias lane per block
PACK_ROWS = 80                                          # multiple of 8
PACK_LANES = 128                                        # lane-aligned


def _round_up(x, m):
    return ((x + m - 1) // m) * m


def autoencoder_kernel(x_ref, p_ref, o_ref):
    # x is feature-major: (30, TILE_LANES).  Cast to f32 immediately (v5e VPU
    # has no bf16); all math below is f32, only the store goes back to io dtype.
    x = x_ref[...].astype(jnp.float32)

    # static slices into the resident packed slab (W^T blocks + bias columns)
    w1t = p_ref[W1_R:W1_R + 16, 0:30]
    b1 = p_ref[W1_R:W1_R + 16, B1_C:B1_C + 1]
    w2t = p_ref[W2_R:W2_R + 8, 0:16]
    b2 = p_ref[W2_R:W2_R + 8, B2_C:B2_C + 1]
    w34t = p_ref[W34_R:W34_R + 8, 0:8]
    b34 = p_ref[W34_R:W34_R + 8, B34_C:B34_C + 1]
    w5t = p_ref[W5_R:W5_R + 16, 0:8]
    b5 = p_ref[W5_R:W5_R + 16, B5_C:B5_C + 1]
    w6t = p_ref[W6_R:W6_R + 30, 0:16]
    b6 = p_ref[W6_R:W6_R + 30, B6_C:B6_C + 1]

    # y^T = W^T @ x^T + b  (biases broadcast along the lane/batch axis)
    h = jnp.maximum(jnp.dot(w1t, x, preferred_element_type=jnp.float32) + b1, 0.0)
    h = jnp.maximum(jnp.dot(w2t, h, preferred_element_type=jnp.float32) + b2, 0.0)
    # folded Linear(8,3)+Linear(3,8) (no ReLU between them in the module);
    # the ReLU after it is the decoder's first ReLU.
    h = jnp.maximum(jnp.dot(w34t, h, preferred_element_type=jnp.float32) + b34, 0.0)
    h = jnp.maximum(jnp.dot(w5t, h, preferred_element_type=jnp.float32) + b5, 0.0)
    y = jnp.dot(w6t, h, preferred_element_type=jnp.float32) + b6

    o_ref[...] = y.astype(o_ref.dtype)


def init_params(key):
    """PyTorch-Linear-style init: W (in,out), b (out,), uniform(+-1/sqrt(fan_in))."""
    dims = [(30, 16), (16, 8), (8, 3), (3, 8), (8, 16), (16, 30)]
    params = []
    for (fan_in, fan_out) in dims:
        key, kw, kb = jax.random.split(key, 3)
        bound = 1.0 / (fan_in ** 0.5)
        w = jax.random.uniform(kw, (fan_in, fan_out), jnp.float32, -bound, bound)
        b = jax.random.uniform(kb, (fan_out,), jnp.float32, -bound, bound)
        params.append((w, b))
    return params


def pack_params(params):
    """Fold the ReLU-free middle pair, transpose weights, pack into one slab."""
    (w1, b1), (w2, b2), (w3, b3), (w4, b4), (w5, b5), (w6, b6) = params
    w34 = w3 @ w4                 # (8, 8), exact fold (no ReLU between 3 & 4)
    b34 = b3 @ w4 + b4            # (8,)

    slab = jnp.zeros((PACK_ROWS, PACK_LANES), jnp.float32)

    def put(s, row, w, b, bias_col):
        wt = w.T                                        # (out, in)
        s = s.at[row:row + wt.shape[0], 0:wt.shape[1]].set(wt)
        s = s.at[row:row + wt.shape[0], bias_col].set(b)
        return s

    slab = put(slab, W1_R, w1, b1, B1_C)
    slab = put(slab, W2_R, w2, b2, B2_C)
    slab = put(slab, W34_R, w34, b34, B34_C)
    slab = put(slab, W5_R, w5, b5, B5_C)
    slab = put(slab, W6_R, w6, b6, B6_C)
    return slab


def autoencoder_forward(x, slab, *, tile_lanes=None, io_dtype=jnp.bfloat16):
    """x: (B, 30) float.  Returns (B, 30) float32."""
    B, F = x.shape
    assert F == 30

    bp_min = _round_up(B, 128)
    if tile_lanes is None:
        if bp_min <= 128:
            tile_lanes = 128                           # single tiny tile
        else:
            # >=2 grid steps (v7x megacore), cap at 4096 lanes / step.
            tile_lanes = min(4096, _round_up(pl.cdiv(bp_min, 2), 128))
    assert tile_lanes % 128 == 0, "tile_lanes must be a multiple of 128 (lanes)"

    bp = _round_up(B, tile_lanes)
    grid = bp // tile_lanes

    # feature-major, bf16 I/O (layout plumbing stays outside the kernel)
    xt = x.T.astype(io_dtype)                           # (30, B)
    if bp != B:
        xt = jnp.pad(xt, ((0, 0), (0, bp - B)))

    out_t = pl.pallas_call(
        autoencoder_kernel,
        out_shape=jax.ShapeDtypeStruct((30, bp), io_dtype),
        grid=(grid,),
        in_specs=[
            pl.BlockSpec((30, tile_lanes), lambda i: (0, i)),            # x^T tile
            pl.BlockSpec((PACK_ROWS, PACK_LANES), lambda i: (0, 0)),      # resident params
        ],
        out_specs=pl.BlockSpec((30, tile_lanes), lambda i: (0, i)),
        compiler_params=pltpu.CompilerParams(
            dimension_semantics=("parallel",)),
    )(xt, slab)

    return out_t[:, :B].T.astype(jnp.float32)


def reference_forward(x, params):
    h = x
    for i, (w, b) in enumerate(params):
        h = h @ w + b
        if i not in (2, 5):   # no ReLU after encoder's / decoder's last layer
            h = jnp.maximum(h, 0.0)
    return h


if __name__ == "__main__":
    key = jax.random.PRNGKey(0)
    key_params, key_x1, key_x2 = jax.random.split(key, 3)

    params = init_params(key_params)
    slab = pack_params(params)

    # --- small batch, f32 I/O path (tight numerical check) -----------------
    B1 = 64
    x1 = jax.random.normal(key_x1, (B1, 30), jnp.float32)
    out1 = jax.block_until_ready(
        autoencoder_forward(x1, slab, io_dtype=jnp.float32))
    ref1 = reference_forward(x1, params)
    assert out1.shape == (B1, 30)
    assert jnp.allclose(out1, ref1, atol=1e-3, rtol=1e-3), "f32 path mismatch"

    # --- larger batch, default bf16 I/O path (multi-step grid) -------------
    B2 = 512
    x2 = jax.random.normal(key_x2, (B2, 30), jnp.float32)
    out2 = jax.block_until_ready(autoencoder_forward(x2, slab))   # bf16 I/O
    ref2 = reference_forward(x2, params)
    assert out2.shape == (B2, 30)
    # bf16 input/output quantization (~2^-8 relative) bounds the error here
    assert jnp.allclose(out2, ref2, atol=5e-2, rtol=5e-2), "bf16 path mismatch"

    print("KERNEL_OK")
</pallas_src>

<mosaic_0001>
module attributes {stable_mosaic.version = 11 : i64} {
  func.func @autoencoder_kernel(%arg0: i32, %arg1: memref<30x128xf32, #tpu.memory_space<vmem>>, %arg2: memref<80x128xf32, #tpu.memory_space<vmem>>, %arg3: memref<30x128xf32, #tpu.memory_space<vmem>>) attributes {dimension_semantics = [#tpu.dimension_semantics<parallel>], iteration_bounds = array<i64: 1>, scalar_prefetch = 0 : i64, scratch_operands = 0 : i64, tpu.core_type = #tpu.core_type<tc>, window_params = [{transform_indices = @transform_0, window_bounds = array<i64: 30, 128>}, {pipeline_mode = #tpu.pipeline_mode<synchronous>, transform_indices = @transform_1, window_bounds = array<i64: 80, 128>}, {transform_indices = @transform_2, window_bounds = array<i64: 30, 128>}]} {
    %c0 = arith.constant 0 : index
    %c0_0 = arith.constant 0 : index
    %0 = vector.load %arg1[%c0, %c0_0] : memref<30x128xf32, #tpu.memory_space<vmem>>, vector<30x128xf32>
    %c0_1 = arith.constant 0 : index
    %c0_2 = arith.constant 0 : index
    %1 = vector.load %arg2[%c0_1, %c0_2] : memref<80x128xf32, #tpu.memory_space<vmem>>, vector<16x30xf32>
    %c0_3 = arith.constant 0 : index
    %c30 = arith.constant 30 : index
    %2 = vector.load %arg2[%c0_3, %c30] : memref<80x128xf32, #tpu.memory_space<vmem>>, vector<16x1xf32>
    %c16 = arith.constant 16 : index
    %c0_4 = arith.constant 0 : index
    %3 = vector.load %arg2[%c16, %c0_4] : memref<80x128xf32, #tpu.memory_space<vmem>>, vector<8x16xf32>
    %c16_5 = arith.constant 16 : index
    %c16_6 = arith.constant 16 : index
    %4 = vector.load %arg2[%c16_5, %c16_6] : memref<80x128xf32, #tpu.memory_space<vmem>>, vector<8x1xf32>
    %c24 = arith.constant 24 : index
    %c0_7 = arith.constant 0 : index
    %5 = vector.load %arg2[%c24, %c0_7] : memref<80x128xf32, #tpu.memory_space<vmem>>, vector<8x8xf32>
    %c24_8 = arith.constant 24 : index
    %c8 = arith.constant 8 : index
    %6 = vector.load %arg2[%c24_8, %c8] : memref<80x128xf32, #tpu.memory_space<vmem>>, vector<8x1xf32>
    %c32 = arith.constant 32 : index
    %c0_9 = arith.constant 0 : index
    %7 = vector.load %arg2[%c32, %c0_9] : memref<80x128xf32, #tpu.memory_space<vmem>>, vector<16x8xf32>
    %c32_10 = arith.constant 32 : index
    %c8_11 = arith.constant 8 : index
    %8 = vector.load %arg2[%c32_10, %c8_11] : memref<80x128xf32, #tpu.memory_space<vmem>>, vector<16x1xf32>
    %c48 = arith.constant 48 : index
    %c0_12 = arith.constant 0 : index
    %9 = vector.load %arg2[%c48, %c0_12] : memref<80x128xf32, #tpu.memory_space<vmem>>, vector<30x16xf32>
    %c48_13 = arith.constant 48 : index
    %c16_14 = arith.constant 16 : index
    %10 = vector.load %arg2[%c48_13, %c16_14] : memref<80x128xf32, #tpu.memory_space<vmem>>, vector<30x1xf32>
    %cst = arith.constant dense<0.000000e+00> : vector<16x128xf32>
    %11 = tpu.matmul %1, %0, %cst {dimension_numbers = #tpu.dot_dimension_numbers<[1], [0], [0], [1], [0, 0, 1, 1], [], []>} : vector<16x30xf32>, vector<30x128xf32>, vector<16x128xf32> -> vector<16x128xf32>
    %12 = vector.broadcast %2 : vector<16x1xf32> to vector<16x128xf32>
    %13 = arith.addf %11, %12 : vector<16x128xf32>
    %cst_15 = arith.constant 0.000000e+00 : f32
    %14 = vector.broadcast %cst_15 : f32 to vector<16x128xf32>
    %15 = arith.maximumf %13, %14 : vector<16x128xf32>
    %cst_16 = arith.constant dense<0.000000e+00> : vector<8x128xf32>
    %16 = tpu.matmul %3, %15, %cst_16 {dimension_numbers = #tpu.dot_dimension_numbers<[1], [0], [0], [1], [0, 0, 1, 1], [], []>} : vector<8x16xf32>, vector<16x128xf32>, vector<8x128xf32> -> vector<8x128xf32>
    %17 = vector.broadcast %4 : vector<8x1xf32> to vector<8x128xf32>
    %18 = arith.addf %16, %17 : vector<8x128xf32>
    %cst_17 = arith.constant 0.000000e+00 : f32
    %19 = vector.broadcast %cst_17 : f32 to vector<8x128xf32>
    %20 = arith.maximumf %18, %19 : vector<8x128xf32>
    %cst_18 = arith.constant dense<0.000000e+00> : vector<8x128xf32>
    %21 = tpu.matmul %5, %20, %cst_18 {dimension_numbers = #tpu.dot_dimension_numbers<[1], [0], [0], [1], [0, 0, 1, 1], [], []>} : vector<8x8xf32>, vector<8x128xf32>, vector<8x128xf32> -> vector<8x128xf32>
    %22 = vector.broadcast %6 : vector<8x1xf32> to vector<8x128xf32>
    %23 = arith.addf %21, %22 : vector<8x128xf32>
    %cst_19 = arith.constant 0.000000e+00 : f32
    %24 = vector.broadcast %cst_19 : f32 to vector<8x128xf32>
    %25 = arith.maximumf %23, %24 : vector<8x128xf32>
    %cst_20 = arith.constant dense<0.000000e+00> : vector<16x128xf32>
    %26 = tpu.matmul %7, %25, %cst_20 {dimension_numbers = #tpu.dot_dimension_numbers<[1], [0], [0], [1], [0, 0, 1, 1], [], []>} : vector<16x8xf32>, vector<8x128xf32>, vector<16x128xf32> -> vector<16x128xf32>
    %27 = vector.broadcast %8 : vector<16x1xf32> to vector<16x128xf32>
    %28 = arith.addf %26, %27 : vector<16x128xf32>
    %cst_21 = arith.constant 0.000000e+00 : f32
    %29 = vector.broadcast %cst_21 : f32 to vector<16x128xf32>
    %30 = arith.maximumf %28, %29 : vector<16x128xf32>
    %cst_22 = arith.constant dense<0.000000e+00> : vector<30x128xf32>
    %31 = tpu.matmul %9, %30, %cst_22 {dimension_numbers = #tpu.dot_dimension_numbers<[1], [0], [0], [1], [0, 0, 1, 1], [], []>} : vector<30x16xf32>, vector<16x128xf32>, vector<30x128xf32> -> vector<30x128xf32>
    %32 = vector.broadcast %10 : vector<30x1xf32> to vector<30x128xf32>
    %33 = arith.addf %31, %32 : vector<30x128xf32>
    %c0_23 = arith.constant 0 : index
    %c0_24 = arith.constant 0 : index
    %34 = vector.load %arg3[%c0_23, %c0_24] : memref<30x128xf32, #tpu.memory_space<vmem>>, vector<30x128xf32>
    tpu.vector_store %arg3[%c0_23, %c0_24], %33 {strides = array<i32>} : memref<30x128xf32, #tpu.memory_space<vmem>>, vector<30x128xf32>,
    return
  }
  func.func @transform_0(%arg0: i32) -> (i32, i32) {
    %c0_i32 = arith.constant 0 : i32
    %c0_i32_0 = arith.constant 0 : i32
    return %c0_i32, %arg0 : i32, i32
  }
  func.func @transform_1(%arg0: i32) -> (i32, i32) {
    %c0_i32 = arith.constant 0 : i32
    %c0_i32_0 = arith.constant 0 : i32
    %c0_i32_1 = arith.constant 0 : i32
    return %c0_i32, %c0_i32_0 : i32, i32
  }
  func.func @transform_2(%arg0: i32) -> (i32, i32) {
    %c0_i32 = arith.constant 0 : i32
    %c0_i32_0 = arith.constant 0 : i32
    return %c0_i32, %arg0 : i32, i32
  }
}

</mosaic_0001>

<llo_original>
// kernel: tpu_custom_call.1
$region0: #{tpu_custom_call.1}
  #allocation0 [shape = 'u32[]', space=smem, size = 0x4, offset = 0x4, fixed_abs, tag = 'smem constant byte address 0x4 - core index']
  #allocation1 [shape = 'u32[144,128]{1,0:T(1,128)}', space=vmem, size = 0x12000, scoped, tag = 'internal scratch']
  %s0 = inlined_call_operand.hbm [shape: f32[30,128], index: 0, kind: input, shape index: {}]
  %s1 = inlined_call_operand.hbm [shape: f32[80,128], index: 1, kind: input, shape index: {}]
  %s2 = inlined_call_operand.hbm [shape: f32[30,128], index: 2, kind: output, shape index: {}]
  %s3 = sld [smem:[#allocation0]]
  $region26: #{tpu_custom_call.1} parent=0
    _
  %s5 = ssub.s32 1, %s3
  %s6 = scalar_select 0, %s5, %s3
  $region1: #{tpu_custom_call.1} parent=0
    #allocation2 [shape = 'u8[16384]{0}', space=vmem, size = 0x4000, scoped, tag = 'input window, operand 0, single buffered']
    #allocation3 [shape = 's32[1]{0}', space=sflag, size = 0x4, scoped, tag = 'scoped memory for tpu_custom_call.1']
    #allocation4 [shape = 's32[1]{0}', space=sflag, size = 0x4, scoped, tag = 'scoped memory for tpu_custom_call.1']
    #allocation5 [shape = 'u8[40960]{0}', space=vmem, size = 0xa000, scoped, tag = 'input window, operand 1, single buffered']
    #allocation6 [shape = 's32[1]{0}', space=sflag, size = 0x4, scoped, tag = 'scoped memory for tpu_custom_call.1']
    #allocation7 [shape = 'u8[16384]{0}', space=vmem, size = 0x4000, scoped, tag = 'output window, operand 0, single buffered']
    %7 = vsyncpa [#allocation3], 0
    %8 = vsyncpa [#allocation6], 0
    %9 = vsyncpa [#allocation4], 0
    // Predicated region
    $region2: #{tpu_custom_call.1} parent=1 // pred_check
      _
    $region3: #{tpu_custom_call.1} parent=1 // pred_check_branch
      %11 = sbr.rel (0) target = $region5
    $region4: #{tpu_custom_call.1} parent=1 // pred_region
      %s13 = ssub.s32 512, 512
      %14 = vsyncadd [#allocation3], %s13
      %s15 = sshll.u32 [#allocation2], 4
      %s16 = int_to_ptr.vmem [resolvable:$true] %s15
      %21 = dma.hbm_to_vmem [thread:$0]  %s0, 512, %s16, [#allocation3], 128, 128, 8
    $region5: #{tpu_custom_call.1} parent=1 // pred_fallthru
      _
    // Predicated region
    $region6: #{tpu_custom_call.1} parent=1 // pred_check
      _
    $region7: #{tpu_custom_call.1} parent=1 // pred_check_branch
      %23 = sbr.rel (0) target = $region9
    $region8: #{tpu_custom_call.1} parent=1 // pred_region
      %s25 = ssub.s32 1280, 1280
      %26 = vsyncadd [#allocation6], %s25
      %s27 = sshll.u32 [#allocation5], 4
      %s28 = int_to_ptr.vmem [resolvable:$true] %s27
      %33 = dma.hbm_to_vmem [thread:$0]  %s1, 1280, %s28, [#allocation6], 128, 128, 8
    $region9: #{tpu_custom_call.1} parent=1 // pred_fallthru
      _
    // Predicated region
    $region10: #{tpu_custom_call.1} parent=1 // pred_check
      _
    $region11: #{tpu_custom_call.1} parent=1 // pred_check_branch
      %35 = sbr.rel (0) target = $region13
    $region12: #{tpu_custom_call.1} parent=1 // pred_region
      %36 = dma.done [#allocation3], 512
    $region13: #{tpu_custom_call.1} parent=1 // pred_fallthru
      _
    // Predicated region
    $region14: #{tpu_custom_call.1} parent=1 // pred_check
      _
    $region15: #{tpu_custom_call.1} parent=1 // pred_check_branch
      %38 = sbr.rel (0) target = $region17
    $region16: #{tpu_custom_call.1} parent=1 // pred_region
      %39 = dma.done [#allocation6], 1280
    $region17: #{tpu_custom_call.1} parent=1 // pred_fallthru
      _
    %v40 = vld [vmem:[#allocation2] sm:$0xff]
    %v41 = vld [vmem:[#allocation2 + $0x8] sm:$0xff]
    %v42 = vld [vmem:[#allocation2 + $0x10] sm:$0xff]
    %v43 = vld [vmem:[#allocation2 + $0x18] sm:$0x3f]
    %v44 = vld [vmem:[#allocation5] sm:$0xff]
    %v45 = vld [vmem:[#allocation5 + $0x8] sm:$0xff]
    %v46 = vld [vmem:[#allocation5 + $0x10] sm:$0xff]
    %v47 = vld [vmem:[#allocation5 + $0x18] sm:$0xff]
    %v48 = vld [vmem:[#allocation5 + $0x20] sm:$0xff]
    %v49 = vld [vmem:[#allocation5 + $0x28] sm:$0xff]
    %v50 = vld [vmem:[#allocation5 + $0x30] sm:$0xff]
    %v51 = vld [vmem:[#allocation5 + $0x38] sm:$0xff]
    %v52 = vld [vmem:[#allocation5 + $0x40] sm:$0xff]
    %v53 = vld [vmem:[#allocation5 + $0x48] sm:$0x3f]
    %55 = vset.pattern.permute.xlu0 30
    %56 = vperm.xlu0 %55, %v44
    %v57 = vpop.permute.xlu0 %56
    %60 = vset.pattern.permute.xlu0 30
    %61 = vperm.xlu0 %60, %v45
    %v62 = vpop.permute.xlu0 %61
    %vm64 = vcmask 244736
    %v65 = vsel %vm64, %v44, 0
    %v67 = vsel %vm64, %v45, 0
    %vm69 = vcmask 1045504
    %v71 = vsel %vm69, %v43, 0
    %73 = vmatprep.subr.mxu0 0.0
    %74 = vmatpush1.msra.mxu0 %v40
    %75 = vmatprep.subr.mxu0 0.0
    %76 = vmatpush1.msra.mxu0 %v41
    %77 = vmatprep.subr.mxu0 0.0
    %78 = vmatpush1.msra.mxu0 %v42
    %79 = vmatprep.subr.mxu0 0.0
    %80 = vmatpush1.msra.mxu0 %v71
    %81 = vmatprep.subr.mxu0 0.0
    %82 = vmatpush1.msra.mxu0 0.0
    %83 = vmatprep.subr.mxu0 0.0
    %84 = vmatpush1.msra.mxu0 0.0
    %85 = vmatprep.subr.mxu0 0.0
    %86 = vmatpush1.msra.mxu0 0.0
    %87 = vmatprep.subr.mxu0 0.0
    %88 = vmatpush1.msra.mxu0 0.0
    %89 = vmatprep.subr.mxu0 0.0
    %90 = vmatpush1.msra.mxu0 0.0
    %91 = vmatprep.subr.mxu0 0.0
    %92 = vmatpush1.msra.mxu0 0.0
    %93 = vmatprep.subr.mxu0 0.0
    %94 = vmatpush1.msra.mxu0 0.0
    %95 = vmatprep.subr.mxu0 0.0
    %96 = vmatpush1.msra.mxu0 0.0
    %97 = vmatprep.subr.mxu0 0.0
    %98 = vmatpush1.msra.mxu0 0.0
    %99 = vmatprep.subr.mxu0 0.0
    %100 = vmatpush1.msra.mxu0 0.0
    %101 = vmatprep.subr.mxu0 0.0
    %102 = vmatpush1.msra.mxu0 0.0
    %103 = vmatprep.subr.mxu0 0.0
    %104 = vmatpush1.msra.mxu0 0.0
    %105 = vmatprep.subr.mxu0 0.0
    %106 = vmatpush1.msra.mxu0 0.0
    %107 = vmatprep.subr.mxu0 0.0
    %108 = vmatpush1.msra.mxu0 0.0
    %109 = vmatprep.subr.mxu0 0.0
    %110 = vmatpush1.msra.mxu0 0.0
    %111 = vmatprep.subr.mxu0 0.0
    %112 = vmatpush1.msra.mxu0 0.0
    %113 = vmatprep.subr.mxu0 0.0
    %114 = vmatpush1.msra.mxu0 0.0
    %115 = vmatprep.subr.mxu0 0.0
    %116 = vmatpush1.msra.mxu0 0.0
    %117 = vmatprep.subr.mxu0 0.0
    %118 = vmatpush1.msra.mxu0 0.0
    %119 = vmatprep.subr.mxu0 0.0
    %120 = vmatpush1.msra.mxu0 0.0
    %121 = vmatprep.subr.mxu0 0.0
    %122 = vmatpush1.msra.mxu0 0.0
    %123 = vmatprep.subr.mxu0 0.0
    %124 = vmatpush1.msra.mxu0 0.0
    %125 = vmatprep.subr.mxu0 0.0
    %126 = vmatpush1.msra.mxu0 0.0
    %127 = vmatprep.subr.mxu0 0.0
    %128 = vmatpush1.msra.mxu0 0.0
    %129 = vmatprep.subr.mxu0 0.0
    %130 = vmatpush1.msra.mxu0 0.0
    %131 = vmatprep.subr.mxu0 0.0
    %132 = vmatpush1.msra.mxu0 0.0
    %133 = vmatprep.subr.mxu0 0.0
    %134 = vmatpush1.msra.mxu0 0.0
    %135 = vmatprep.subr.mxu0 0.0
    %136 = vmatpush1.msra.mxu0 0.0
    %137 = vmatprep.mubr.f32.mxu0 0.0
    %138 = vmatmul.mubr.f32.gmra.mrb[0].mxu0 %v65
    %v139 = vpop.f32.mrb[0].mxu0
    %v140 = vadd.f32 %v57, %v139
    %v141 = vpop.f32.mrb[0].mxu0
    %142 = vmatprep.mubr.f32.mxu0 0.0
    %143 = vmatmul.mubr.f32.gmra.mrb[0].mxu0 %v67
    %v144 = vpop.f32.mrb[0].mxu0
    %v145 = vadd.f32 %v62, %v144
    %v146 = vpop.f32.mrb[0].mxu0
    %147 = vdwg.mxu0
    %v148 = vmax.f32 %v140, 0.0
    %v149 = vmax.f32 %v145, 0.0
    %151 = vset.pattern.permute.xlu0 16
    %152 = vperm.xlu0 %151, %v46
    %v153 = vpop.permute.xlu0 %152
    %vm155 = vcmask 130048
    %v156 = vsel %vm155, %v46, 0
    %158 = vmatprep.subr.mxu0 0.0
    %159 = vmatpush1.msra.mxu0 %v148
    %160 = vmatprep.subr.mxu0 0.0
    %161 = vmatpush1.msra.mxu0 %v149
    %162 = vmatprep.subr.mxu0 0.0
    %163 = vmatpush1.msra.mxu0 0.0
    %164 = vmatprep.subr.mxu0 0.0
    %165 = vmatpush1.msra.mxu0 0.0
    %166 = vmatprep.subr.mxu0 0.0
    %167 = vmatpush1.msra.mxu0 0.0
    %168 = vmatprep.subr.mxu0 0.0
    %169 = vmatpush1.msra.mxu0 0.0
    %170 = vmatprep.subr.mxu0 0.0
    %171 = vmatpush1.msra.mxu0 0.0
    %172 = vmatprep.subr.mxu0 0.0
    %173 = vmatpush1.msra.mxu0 0.0
    %174 = vmatprep.subr.mxu0 0.0
    %175 = vmatpush1.msra.mxu0 0.0
    %176 = vmatprep.subr.mxu0 0.0
    %177 = vmatpush1.msra.mxu0 0.0
    %178 = vmatprep.subr.mxu0 0.0
    %179 = vmatpush1.msra.mxu0 0.0
    %180 = vmatprep.subr.mxu0 0.0
    %181 = vmatpush1.msra.mxu0 0.0
    %182 = vmatprep.subr.mxu0 0.0
    %183 = vmatpush1.msra.mxu0 0.0
    %184 = vmatprep.subr.mxu0 0.0
    %185 = vmatpush1.msra.mxu0 0.0
    %186 = vmatprep.subr.mxu0 0.0
    %187 = vmatpush1.msra.mxu0 0.0
    %188 = vmatprep.subr.mxu0 0.0
    %189 = vmatpush1.msra.mxu0 0.0
    %190 = vmatprep.subr.mxu0 0.0
    %191 = vmatpush1.msra.mxu0 0.0
    %192 = vmatprep.subr.mxu0 0.0
    %193 = vmatpush1.msra.mxu0 0.0
    %194 = vmatprep.subr.mxu0 0.0
    %195 = vmatpush1.msra.mxu0 0.0
    %196 = vmatprep.subr.mxu0 0.0
    %197 = vmatpush1.msra.mxu0 0.0
    %198 = vmatprep.subr.mxu0 0.0
    %199 = vmatpush1.msra.mxu0 0.0
    %200 = vmatprep.subr.mxu0 0.0
    %201 = vmatpush1.msra.mxu0 0.0
    %202 = vmatprep.subr.mxu0 0.0
    %203 = vmatpush1.msra.mxu0 0.0
    %204 = vmatprep.subr.mxu0 0.0
    %205 = vmatpush1.msra.mxu0 0.0
    %206 = vmatprep.subr.mxu0 0.0
    %207 = vmatpush1.msra.mxu0 0.0
    %208 = vmatprep.subr.mxu0 0.0
    %209 = vmatpush1.msra.mxu0 0.0
    %210 = vmatprep.subr.mxu0 0.0
    %211 = vmatpush1.msra.mxu0 0.0
    %212 = vmatprep.subr.mxu0 0.0
    %213 = vmatpush1.msra.mxu0 0.0
    %214 = vmatprep.subr.mxu0 0.0
    %215 = vmatpush1.msra.mxu0 0.0
    %216 = vmatprep.subr.mxu0 0.0
    %217 = vmatpush1.msra.mxu0 0.0
    %218 = vmatprep.subr.mxu0 0.0
    %219 = vmatpush1.msra.mxu0 0.0
    %220 = vmatprep.subr.mxu0 0.0
    %221 = vmatpush1.msra.mxu0 0.0
    %222 = vmatprep.mubr.f32.mxu0 0.0
    %223 = vmatmul.mubr.f32.gmra.mrb[0].mxu0 %v156
    %v224 = vpop.f32.mrb[0].mxu0
    %v225 = vadd.f32 %v153, %v224
    %v226 = vpop.f32.mrb[0].mxu0
    %227 = vdwg.mxu0
    %v228 = vmax.f32 %v225, 0.0
    %230 = vset.pattern.permute.xlu0 8
    %231 = vperm.xlu0 %230, %v47
    %v232 = vpop.permute.xlu0 %231
    %vm234 = vcmask 64512
    %v235 = vsel %vm234, %v47, 0
    %237 = vmatprep.subr.mxu0 0.0
    %238 = vmatpush1.msra.mxu0 %v228
    %239 = vmatprep.subr.mxu0 0.0
    %240 = vmatpush1.msra.mxu0 0.0
    %241 = vmatprep.subr.mxu0 0.0
    %242 = vmatpush1.msra.mxu0 0.0
    %243 = vmatprep.subr.mxu0 0.0
    %244 = vmatpush1.msra.mxu0 0.0
    %245 = vmatprep.subr.mxu0 0.0
    %246 = vmatpush1.msra.mxu0 0.0
    %247 = vmatprep.subr.mxu0 0.0
    %248 = vmatpush1.msra.mxu0 0.0
    %249 = vmatprep.subr.mxu0 0.0
    %250 = vmatpush1.msra.mxu0 0.0
    %251 = vmatprep.subr.mxu0 0.0
    %252 = vmatpush1.msra.mxu0 0.0
    %253 = vmatprep.subr.mxu0 0.0
    %254 = vmatpush1.msra.mxu0 0.0
    %255 = vmatprep.subr.mxu0 0.0
    %256 = vmatpush1.msra.mxu0 0.0
    %257 = vmatprep.subr.mxu0 0.0
    %258 = vmatpush1.msra.mxu0 0.0
    %259 = vmatprep.subr.mxu0 0.0
    %260 = vmatpush1.msra.mxu0 0.0
    %261 = vmatprep.subr.mxu0 0.0
    %262 = vmatpush1.msra.mxu0 0.0
    %263 = vmatprep.subr.mxu0 0.0
    %264 = vmatpush1.msra.mxu0 0.0
    %265 = vmatprep.subr.mxu0 0.0
    %266 = vmatpush1.msra.mxu0 0.0
    %267 = vmatprep.subr.mxu0 0.0
    %268 = vmatpush1.msra.mxu0 0.0
    %269 = vmatprep.subr.mxu0 0.0
    %270 = vmatpush1.msra.mxu0 0.0
    %271 = vmatprep.subr.mxu0 0.0
    %272 = vmatpush1.msra.mxu0 0.0
    %273 = vmatprep.subr.mxu0 0.0
    %274 = vmatpush1.msra.mxu0 0.0
    %275 = vmatprep.subr.mxu0 0.0
    %276 = vmatpush1.msra.mxu0 0.0
    %277 = vmatprep.subr.mxu0 0.0
    %278 = vmatpush1.msra.mxu0 0.0
    %279 = vmatprep.subr.mxu0 0.0
    %280 = vmatpush1.msra.mxu0 0.0
    %281 = vmatprep.subr.mxu0 0.0
    %282 = vmatpush1.msra.mxu0 0.0
    %283 = vmatprep.subr.mxu0 0.0
    %284 = vmatpush1.msra.mxu0 0.0
    %285 = vmatprep.subr.mxu0 0.0
    %286 = vmatpush1.msra.mxu0 0.0
    %287 = vmatprep.subr.mxu0 0.0
    %288 = vmatpush1.msra.mxu0 0.0
    %289 = vmatprep.subr.mxu0 0.0
    %290 = vmatpush1.msra.mxu0 0.0
    %291 = vmatprep.subr.mxu0 0.0
    %292 = vmatpush1.msra.mxu0 0.0
    %293 = vmatprep.subr.mxu0 0.0
    %294 = vmatpush1.msra.mxu0 0.0
    %295 = vmatprep.subr.mxu0 0.0
    %296 = vmatpush1.msra.mxu0 0.0
    %297 = vmatprep.subr.mxu0 0.0
    %298 = vmatpush1.msra.mxu0 0.0
    %299 = vmatprep.subr.mxu0 0.0
    %300 = vmatpush1.msra.mxu0 0.0
    %301 = vmatprep.mubr.f32.mxu0 0.0
    %302 = vmatmul.mubr.f32.gmra.mrb[0].mxu0 %v235
    %v303 = vpop.f32.mrb[0].mxu0
    %v304 = vadd.f32 %v232, %v303
    %v305 = vpop.f32.mrb[0].mxu0
    %306 = vdwg.mxu0
    %v307 = vmax.f32 %v304, 0.0
    %309 = vset.pattern.permute.xlu0 8
    %310 = vperm.xlu0 %309, %v48
    %v311 = vpop.permute.xlu0 %310
    %314 = vset.pattern.permute.xlu0 8
    %315 = vperm.xlu0 %314, %v49
    %v316 = vpop.permute.xlu0 %315
    %v318 = vsel %vm234, %v48, 0
    %v320 = vsel %vm234, %v49, 0
    %322 = vmatprep.subr.mxu0 0.0
    %323 = vmatpush1.msra.mxu0 %v307
    %324 = vmatprep.subr.mxu0 0.0
    %325 = vmatpush1.msra.mxu0 0.0
    %326 = vmatprep.subr.mxu0 0.0
    %327 = vmatpush1.msra.mxu0 0.0
    %328 = vmatprep.subr.mxu0 0.0
    %329 = vmatpush1.msra.mxu0 0.0
    %330 = vmatprep.subr.mxu0 0.0
    %331 = vmatpush1.msra.mxu0 0.0
    %332 = vmatprep.subr.mxu0 0.0
    %333 = vmatpush1.msra.mxu0 0.0
    %334 = vmatprep.subr.mxu0 0.0
    %335 = vmatpush1.msra.mxu0 0.0
    %336 = vmatprep.subr.mxu0 0.0
    %337 = vmatpush1.msra.mxu0 0.0
    %338 = vmatprep.subr.mxu0 0.0
    %339 = vmatpush1.msra.mxu0 0.0
    %340 = vmatprep.subr.mxu0 0.0
    %341 = vmatpush1.msra.mxu0 0.0
    %342 = vmatprep.subr.mxu0 0.0
    %343 = vmatpush1.msra.mxu0 0.0
    %344 = vmatprep.subr.mxu0 0.0
    %345 = vmatpush1.msra.mxu0 0.0
    %346 = vmatprep.subr.mxu0 0.0
    %347 = vmatpush1.msra.mxu0 0.0
    %348 = vmatprep.subr.mxu0 0.0
    %349 = vmatpush1.msra.mxu0 0.0
    %350 = vmatprep.subr.mxu0 0.0
    %351 = vmatpush1.msra.mxu0 0.0
    %352 = vmatprep.subr.mxu0 0.0
    %353 = vmatpush1.msra.mxu0 0.0
    %354 = vmatprep.subr.mxu0 0.0
    %355 = vmatpush1.msra.mxu0 0.0
    %356 = vmatprep.subr.mxu0 0.0
    %357 = vmatpush1.msra.mxu0 0.0
    %358 = vmatprep.subr.mxu0 0.0
    %359 = vmatpush1.msra.mxu0 0.0
    %360 = vmatprep.subr.mxu0 0.0
    %361 = vmatpush1.msra.mxu0 0.0
    %362 = vmatprep.subr.mxu0 0.0
    %363 = vmatpush1.msra.mxu0 0.0
    %364 = vmatprep.subr.mxu0 0.0
    %365 = vmatpush1.msra.mxu0 0.0
    %366 = vmatprep.subr.mxu0 0.0
    %367 = vmatpush1.msra.mxu0 0.0
    %368 = vmatprep.subr.mxu0 0.0
    %369 = vmatpush1.msra.mxu0 0.0
    %370 = vmatprep.subr.mxu0 0.0
    %371 = vmatpush1.msra.mxu0 0.0
    %372 = vmatprep.subr.mxu0 0.0
    %373 = vmatpush1.msra.mxu0 0.0
    %374 = vmatprep.subr.mxu0 0.0
    %375 = vmatpush1.msra.mxu0 0.0
    %376 = vmatprep.subr.mxu0 0.0
    %377 = vmatpush1.msra.mxu0 0.0
    %378 = vmatprep.subr.mxu0 0.0
    %379 = vmatpush1.msra.mxu0 0.0
    %380 = vmatprep.subr.mxu0 0.0
    %381 = vmatpush1.msra.mxu0 0.0
    %382 = vmatprep.subr.mxu0 0.0
    %383 = vmatpush1.msra.mxu0 0.0
    %384 = vmatprep.subr.mxu0 0.0
    %385 = vmatpush1.msra.mxu0 0.0
    %386 = vmatprep.mubr.f32.mxu0 0.0
    %387 = vmatmul.mubr.f32.gmra.mrb[0].mxu0 %v318
    %v388 = vpop.f32.mrb[0].mxu0
    %v389 = vadd.f32 %v311, %v388
    %v390 = vpop.f32.mrb[0].mxu0
    %391 = vmatprep.mubr.f32.mxu0 0.0
    %392 = vmatmul.mubr.f32.gmra.mrb[0].mxu0 %v320
    %v393 = vpop.f32.mrb[0].mxu0
    %v394 = vadd.f32 %v316, %v393
    %v395 = vpop.f32.mrb[0].mxu0
    %396 = vdwg.mxu0
    %v397 = vmax.f32 %v389, 0.0
    %v398 = vmax.f32 %v394, 0.0
    %400 = vset.pattern.permute.xlu0 16
    %401 = vperm.xlu0 %400, %v50
    %v402 = vpop.permute.xlu0 %401
    %405 = vset.pattern.permute.xlu0 16
    %406 = vperm.xlu0 %405, %v51
    %v407 = vpop.permute.xlu0 %406
    %410 = vset.pattern.permute.xlu0 16
    %411 = vperm.xlu0 %410, %v52
    %v412 = vpop.permute.xlu0 %411
    %415 = vset.pattern.permute.xlu0 16
    %416 = vperm.xlu0 %415, %v53
    %v417 = vpop.permute.xlu0 %416
    %v419 = vsel %vm155, %v50, 0
    %v421 = vsel %vm155, %v51, 0
    %v423 = vsel %vm155, %v52, 0
    %v425 = vsel %vm155, %v53, 0
    %427 = vmatprep.subr.mxu0 0.0
    %428 = vmatpush1.msra.mxu0 %v397
    %429 = vmatprep.subr.mxu0 0.0
    %430 = vmatpush1.msra.mxu0 %v398
    %431 = vmatprep.subr.mxu0 0.0
    %432 = vmatpush1.msra.mxu0 0.0
    %433 = vmatprep.subr.mxu0 0.0
    %434 = vmatpush1.msra.mxu0 0.0
    %435 = vmatprep.subr.mxu0 0.0
    %436 = vmatpush1.msra.mxu0 0.0
    %437 = vmatprep.subr.mxu0 0.0
    %438 = vmatpush1.msra.mxu0 0.0
    %439 = vmatprep.subr.mxu0 0.0
    %440 = vmatpush1.msra.mxu0 0.0
    %441 = vmatprep.subr.mxu0 0.0
    %442 = vmatpush1.msra.mxu0 0.0
    %443 = vmatprep.subr.mxu0 0.0
    %444 = vmatpush1.msra.mxu0 0.0
    %445 = vmatprep.subr.mxu0 0.0
    %446 = vmatpush1.msra.mxu0 0.0
    %447 = vmatprep.subr.mxu0 0.0
    %448 = vmatpush1.msra.mxu0 0.0
    %449 = vmatprep.subr.mxu0 0.0
    %450 = vmatpush1.msra.mxu0 0.0
    %451 = vmatprep.subr.mxu0 0.0
    %452 = vmatpush1.msra.mxu0 0.0
    %453 = vmatprep.subr.mxu0 0.0
    %454 = vmatpush1.msra.mxu0 0.0
    %455 = vmatprep.subr.mxu0 0.0
    %456 = vmatpush1.msra.mxu0 0.0
    %457 = vmatprep.subr.mxu0 0.0
    %458 = vmatpush1.msra.mxu0 0.0
    %459 = vmatprep.subr.mxu0 0.0
    %460 = vmatpush1.msra.mxu0 0.0
    %461 = vmatprep.subr.mxu0 0.0
    %462 = vmatpush1.msra.mxu0 0.0
    %463 = vmatprep.subr.mxu0 0.0
    %464 = vmatpush1.msra.mxu0 0.0
    %465 = vmatprep.subr.mxu0 0.0
    %466 = vmatpush1.msra.mxu0 0.0
    %467 = vmatprep.subr.mxu0 0.0
    %468 = vmatpush1.msra.mxu0 0.0
    %469 = vmatprep.subr.mxu0 0.0
    %470 = vmatpush1.msra.mxu0 0.0
    %471 = vmatprep.subr.mxu0 0.0
    %472 = vmatpush1.msra.mxu0 0.0
    %473 = vmatprep.subr.mxu0 0.0
    %474 = vmatpush1.msra.mxu0 0.0
    %475 = vmatprep.subr.mxu0 0.0
    %476 = vmatpush1.msra.mxu0 0.0
    %477 = vmatprep.subr.mxu0 0.0
    %478 = vmatpush1.msra.mxu0 0.0
    %479 = vmatprep.subr.mxu0 0.0
    %480 = vmatpush1.msra.mxu0 0.0
    %481 = vmatprep.subr.mxu0 0.0
    %482 = vmatpush1.msra.mxu0 0.0
    %483 = vmatprep.subr.mxu0 0.0
    %484 = vmatpush1.msra.mxu0 0.0
    %485 = vmatprep.subr.mxu0 0.0
    %486 = vmatpush1.msra.mxu0 0.0
    %487 = vmatprep.subr.mxu0 0.0
    %488 = vmatpush1.msra.mxu0 0.0
    %489 = vmatprep.subr.mxu0 0.0
    %490 = vmatpush1.msra.mxu0 0.0
    %491 = vmatprep.mubr.f32.mxu0 0.0
    %492 = vmatmul.mubr.f32.gmra.mrb[0].mxu0 %v419
    %v493 = vpop.f32.mrb[0].mxu0
    %v494 = vadd.f32 %v402, %v493
    %v495 = vpop.f32.mrb[0].mxu0
    %496 = vmatprep.mubr.f32.mxu0 0.0
    %497 = vmatmul.mubr.f32.gmra.mrb[0].mxu0 %v421
    %v498 = vpop.f32.mrb[0].mxu0
    %v499 = vadd.f32 %v407, %v498
    %v500 = vpop.f32.mrb[0].mxu0
    %501 = vmatprep.mubr.f32.mxu0 0.0
    %502 = vmatmul.mubr.f32.gmra.mrb[0].mxu0 %v423
    %v503 = vpop.f32.mrb[0].mxu0
    %v504 = vadd.f32 %v412, %v503
    %v505 = vpop.f32.mrb[0].mxu0
    %506 = vmatprep.mubr.f32.mxu0 0.0
    %507 = vmatmul.mubr.f32.gmra.mrb[0].mxu0 %v425
    %v508 = vpop.f32.mrb[0].mxu0
    %v509 = vadd.f32 %v417, %v508
    %v510 = vpop.f32.mrb[0].mxu0
    %511 = vdwg.mxu0
    %512 = vst [vmem:[#allocation7] sm:$0xff] %v494
    %513 = vst [vmem:[#allocation7 + $0x8] sm:$0xff] %v499
    %514 = vst [vmem:[#allocation7 + $0x10] sm:$0xff] %v504
    %515 = vst [vmem:[#allocation7 + $0x18] sm:$0x3f] %v509
    // Predicated region
    $region18: #{tpu_custom_call.1} parent=1 // pred_check
      _
    $region19: #{tpu_custom_call.1} parent=1 // pred_check_branch
      %517 = sbr.rel (0) target = $region21
    $region20: #{tpu_custom_call.1} parent=1 // pred_region
      %s519 = ssub.s32 512, 512
      %520 = vsyncadd [#allocation4], %s519
      %s521 = sshll.u32 [#allocation7], 4
      %s522 = int_to_ptr.vmem [resolvable:$true] %s521
      %527 = dma.vmem_to_hbm [thread:$0]  %s522, 512, %s2, [#allocation4], 128, 128, 8
    $region21: #{tpu_custom_call.1} parent=1 // pred_fallthru
      _
    // Predicated region
    $region22: #{tpu_custom_call.1} parent=1 // pred_check
      _
    $region23: #{tpu_custom_call.1} parent=1 // pred_check_branch
      %529 = sbr.rel (0) target = $region25
    $region24: #{tpu_custom_call.1} parent=1 // pred_region
      %530 = dma.done [#allocation4], 512
    $region25: #{tpu_custom_call.1} parent=1 // pred_fallthru
      _
    %531 = vsyncpa [#allocation3], 1
    %532 = vsyncpa [#allocation6], 1
    %533 = vsyncpa [#allocation4], 1

</llo_original>
